<compile_context>
chip_gen: v7x
topology: tpu7x:2x2x1
jax: 0.10.0
libtpu: 0.0.40
codegen_flags: <defaults>
</compile_context>

<pallas_src>
import math
import numpy as np
import jax
import jax.numpy as jnp
from jax.experimental import pallas as pl
from jax.experimental.pallas import tpu as pltpu


def _round_up(a, m):
    return ((a + m - 1) // m) * m


# ----------------------------- Pallas kernel -------------------------------

def _focus_conv_kernel(x_ref, w_ref, shift_ref, o_ref):
    # x_ref:     (1, Kin, TN) bf16 activations (pixels on lanes)
    # w_ref:     (C2p, Kin)   bf16 BN-folded 1x1 conv weight
    # shift_ref: (C2p, 1)     f32 fused BN shift
    # o_ref:     (1, C2p, TN) output (bf16 by default)
    y = jnp.dot(w_ref[...], x_ref[0], preferred_element_type=jnp.float32)
    y = y + shift_ref[...]                                # f32 epilogue
    # SiLU = y * sigmoid(y); sigmoid via one tanh (single EUP op, no overflow).
    y = y * (0.5 * jnp.tanh(0.5 * y) + 0.5)
    o_ref[0] = y.astype(o_ref.dtype)


def focus_pallas(x, conv_w, bn_gamma, bn_beta, bn_mean, bn_var,
                 *, eps=1e-5, tile_n=2048, out_dtype=jnp.bfloat16):
    """Focus forward. x: (B, C1, H, W) f32; conv_w: (C2, 4*C1) f32."""
    B, C1, H, W = x.shape
    assert H % 2 == 0 and W % 2 == 0
    C2 = conv_w.shape[0]
    Kin = 4 * C1
    H2, W2 = H // 2, W // 2
    Npix = H2 * W2

    # --- space-to-depth into transposed-GEMM layout (bf16 cast fused in).
    # channel index in Kin = (2*wp + hp)*C1 + c  (matches torch.cat order).
    xb = x.astype(jnp.bfloat16)
    xr = xb.reshape(B, C1, H2, 2, W2, 2)                  # b, c, h2, hp, w2, wp
    x_t = jnp.transpose(xr, (0, 5, 3, 1, 2, 4)).reshape(B, Kin, Npix)

    # --- fold eval-mode BatchNorm into the bias-free 1x1 conv.
    scale = bn_gamma / jnp.sqrt(bn_var + eps)             # (C2,)
    shift = bn_beta - bn_mean * scale                     # (C2,)
    w_fused = conv_w * scale[:, None]                     # (C2, Kin), f32

    # --- pad C2 only to a sublane multiple (8), pixels to a lane-tile multiple.
    C2p = _round_up(C2, 8)
    TN = min(tile_n, _round_up(Npix, 128))
    Np = _round_up(Npix, TN)

    w_p = jnp.zeros((C2p, Kin), jnp.bfloat16).at[:C2].set(
        w_fused.astype(jnp.bfloat16))
    shift_p = jnp.zeros((C2p, 1), jnp.float32).at[:C2, 0].set(shift)
    if Np != Npix:
        x_t = jnp.pad(x_t, ((0, 0), (0, 0), (0, Np - Npix)))

    out = pl.pallas_call(
        _focus_conv_kernel,
        out_shape=jax.ShapeDtypeStruct((B, C2p, Np), out_dtype),
        grid=(B, Np // TN),
        in_specs=[
            pl.BlockSpec((1, Kin, TN), lambda b, j: (b, 0, j)),   # activations
            pl.BlockSpec((C2p, Kin), lambda b, j: (0, 0)),        # fused weight
            pl.BlockSpec((C2p, 1), lambda b, j: (0, 0)),          # fused BN shift
        ],
        out_specs=pl.BlockSpec((1, C2p, TN), lambda b, j: (b, 0, j)),
        compiler_params=pltpu.CompilerParams(
            dimension_semantics=("parallel", "parallel")),
    )(x_t, w_p, shift_p)

    # channel-major already -> plain reshape, no transpose.
    return out[:, :C2, :Npix].reshape(B, C2, H2, W2)


# --------------------------- pure-JAX reference -----------------------------

def focus_reference(x, conv_w, bn_gamma, bn_beta, bn_mean, bn_var, eps=1e-5):
    a = x[..., ::2, ::2]
    b = x[..., 1::2, ::2]
    c = x[..., ::2, 1::2]
    d = x[..., 1::2, 1::2]
    xc = jnp.concatenate([a, b, c, d], axis=1)            # (B, 4*C1, H2, W2)
    y = jnp.einsum('bchw,oc->bohw', xc, conv_w)           # 1x1 conv, no bias
    scale = bn_gamma / jnp.sqrt(bn_var + eps)
    shift = bn_beta - bn_mean * scale
    y = y * scale[None, :, None, None] + shift[None, :, None, None]
    return y * jax.nn.sigmoid(y)                          # SiLU


# ------------------------------------ main -----------------------------------

if __name__ == "__main__":
    key = jax.random.PRNGKey(0)
    kx, kw, kg, kb, km, kv, kx2 = jax.random.split(key, 7)

    B, C1, C2 = 2, 4, 32
    H = W = 16
    x = jax.random.normal(kx, (B, C1, H, W), jnp.float32)
    conv_w = jax.random.normal(kw, (C2, 4 * C1), jnp.float32) / math.sqrt(4 * C1)
    bn_gamma = 1.0 + 0.1 * jax.random.normal(kg, (C2,), jnp.float32)
    bn_beta = 0.1 * jax.random.normal(kb, (C2,), jnp.float32)
    bn_mean = 0.1 * jax.random.normal(km, (C2,), jnp.float32)
    bn_var = jnp.abs(1.0 + 0.1 * jax.random.normal(kv, (C2,), jnp.float32))

    # bf16 matmul operands + bf16 output -> loose-ish tolerance vs f32 torch.
    out = focus_pallas(x, conv_w, bn_gamma, bn_beta, bn_mean, bn_var)
    out = jax.block_until_ready(out)
    assert out.shape == (B, C2, H // 2, W // 2)
    ref = focus_reference(x, conv_w, bn_gamma, bn_beta, bn_mean, bn_var)
    np.testing.assert_allclose(np.asarray(out, dtype=np.float32),
                               np.asarray(ref), rtol=2e-2, atol=2e-2)

    # second shape: exercises the multi-tile grid and the padded pixel tail.
    H2s = W2s = 48                                        # Npix = 576 -> 5 tiles of 128
    x2 = jax.random.normal(kx2, (B, C1, H2s, W2s), jnp.float32)
    out2 = focus_pallas(x2, conv_w, bn_gamma, bn_beta, bn_mean, bn_var,
                        tile_n=128)
    out2 = jax.block_until_ready(out2)
    ref2 = focus_reference(x2, conv_w, bn_gamma, bn_beta, bn_mean, bn_var)
    np.testing.assert_allclose(np.asarray(out2, dtype=np.float32),
                               np.asarray(ref2), rtol=2e-2, atol=2e-2)

    print("KERNEL_OK")
</pallas_src>

<mosaic_0001>
module attributes {stable_mosaic.version = 11 : i64} {
  func.func @_focus_conv_kernel(%arg0: i32, %arg1: i32, %arg2: memref<1x16x128xbf16, #tpu.memory_space<vmem>>, %arg3: memref<32x16xbf16, #tpu.memory_space<vmem>>, %arg4: memref<32x1xf32, #tpu.memory_space<vmem>>, %arg5: memref<1x32x128xbf16, #tpu.memory_space<vmem>>) attributes {dimension_semantics = [#tpu.dimension_semantics<parallel>, #tpu.dimension_semantics<parallel>], iteration_bounds = array<i64: 2, 1>, scalar_prefetch = 0 : i64, scratch_operands = 0 : i64, tpu.core_type = #tpu.core_type<tc>, window_params = [{transform_indices = @transform_0, window_bounds = array<i64: 1, 16, 128>}, {pipeline_mode = #tpu.pipeline_mode<synchronous>, transform_indices = @transform_1, window_bounds = array<i64: 32, 16>}, {pipeline_mode = #tpu.pipeline_mode<synchronous>, transform_indices = @transform_2, window_bounds = array<i64: 32, 1>}, {transform_indices = @transform_3, window_bounds = array<i64: 1, 32, 128>}]} {
    %c0 = arith.constant 0 : index
    %c0_0 = arith.constant 0 : index
    %0 = vector.load %arg3[%c0, %c0_0] : memref<32x16xbf16, #tpu.memory_space<vmem>>, vector<32x16xbf16>
    %c0_1 = arith.constant 0 : index
    %c0_2 = arith.constant 0 : index
    %c0_3 = arith.constant 0 : index
    %1 = vector.load %arg2[%c0_1, %c0_2, %c0_3] : memref<1x16x128xbf16, #tpu.memory_space<vmem>>, vector<1x16x128xbf16>
    %2 = vector.shape_cast %1 : vector<1x16x128xbf16> to vector<16x128xbf16>
    %cst = arith.constant dense<0.000000e+00> : vector<32x128xf32>
    %3 = tpu.matmul %0, %2, %cst {dimension_numbers = #tpu.dot_dimension_numbers<[1], [0], [0], [1], [0, 0, 1, 1], [], []>} : vector<32x16xbf16>, vector<16x128xbf16>, vector<32x128xf32> -> vector<32x128xf32>
    %c0_4 = arith.constant 0 : index
    %c0_5 = arith.constant 0 : index
    %4 = vector.load %arg4[%c0_4, %c0_5] : memref<32x1xf32, #tpu.memory_space<vmem>>, vector<32x1xf32>
    %5 = vector.broadcast %4 : vector<32x1xf32> to vector<32x128xf32>
    %6 = arith.addf %3, %5 : vector<32x128xf32>
    %cst_6 = arith.constant 5.000000e-01 : f32
    %7 = vector.broadcast %cst_6 : f32 to vector<32x128xf32>
    %8 = arith.mulf %7, %6 : vector<32x128xf32>
    %9 = math.tanh %8 : vector<32x128xf32>
    %cst_7 = arith.constant 5.000000e-01 : f32
    %10 = vector.broadcast %cst_7 : f32 to vector<32x128xf32>
    %11 = arith.mulf %10, %9 : vector<32x128xf32>
    %cst_8 = arith.constant 5.000000e-01 : f32
    %12 = vector.broadcast %cst_8 : f32 to vector<32x128xf32>
    %13 = arith.addf %11, %12 : vector<32x128xf32>
    %14 = arith.mulf %6, %13 : vector<32x128xf32>
    %15 = arith.truncf %14 : vector<32x128xf32> to vector<32x128xbf16>
    %c0_9 = arith.constant 0 : index
    %c0_10 = arith.constant 0 : index
    %c0_11 = arith.constant 0 : index
    %16 = vector.load %arg5[%c0_9, %c0_10, %c0_11] : memref<1x32x128xbf16, #tpu.memory_space<vmem>>, vector<1x32x128xbf16>
    %17 = vector.shape_cast %16 : vector<1x32x128xbf16> to vector<32x128xbf16>
    %18 = vector.shape_cast %15 : vector<32x128xbf16> to vector<1x32x128xbf16>
    tpu.vector_store %arg5[%c0_9, %c0_10, %c0_11], %18 {strides = array<i32>} : memref<1x32x128xbf16, #tpu.memory_space<vmem>>, vector<1x32x128xbf16>,
    return
  }
  func.func @transform_0(%arg0: i32, %arg1: i32) -> (i32, i32, i32) {
    %c0_i32 = arith.constant 0 : i32
    %c0_i32_0 = arith.constant 0 : i32
    return %arg0, %c0_i32, %arg1 : i32, i32, i32
  }
  func.func @transform_1(%arg0: i32, %arg1: i32) -> (i32, i32) {
    %c0_i32 = arith.constant 0 : i32
    %c0_i32_0 = arith.constant 0 : i32
    %c0_i32_1 = arith.constant 0 : i32
    return %c0_i32, %c0_i32_0 : i32, i32
  }
  func.func @transform_2(%arg0: i32, %arg1: i32) -> (i32, i32) {
    %c0_i32 = arith.constant 0 : i32
    %c0_i32_0 = arith.constant 0 : i32
    %c0_i32_1 = arith.constant 0 : i32
    return %c0_i32, %c0_i32_0 : i32, i32
  }
  func.func @transform_3(%arg0: i32, %arg1: i32) -> (i32, i32, i32) {
    %c0_i32 = arith.constant 0 : i32
    %c0_i32_0 = arith.constant 0 : i32
    return %arg0, %c0_i32, %arg1 : i32, i32, i32
  }
}

</mosaic_0001>

<llo_original>
// kernel: tpu_custom_call.1
$region0: #{tpu_custom_call.1}
  #allocation0 [shape = 'u32[]', space=smem, size = 0x4, offset = 0x4, fixed_abs, tag = 'smem constant byte address 0x4 - core index']
  #allocation1 [shape = 'u32[144,128]{1,0:T(1,128)}', space=vmem, size = 0x12000, scoped, tag = 'internal scratch']
  %s0 = inlined_call_operand.vmem [shape: bf16[2,16,128], index: 0, kind: input, shape index: {}]
  %s1 = inlined_call_operand.vmem [shape: bf16[32,16], index: 1, kind: input, shape index: {}]
  %s2 = inlined_call_operand.vmem [shape: f32[32,1], index: 2, kind: input, shape index: {}]
  %s3 = inlined_call_operand.hbm [shape: bf16[2,32,128], index: 3, kind: output, shape index: {}]
  %s4 = sld [smem:[#allocation0]]
  $region45: #{tpu_custom_call.1} parent=0
    _
  %s6 = ssub.s32 1, %s4
  %s7 = scalar_select 0, %s6, %s4
  $region1: #{tpu_custom_call.1} parent=0
    #allocation2 [shape = 'u8[16384]{0}', space=vmem, size = 0x4000, scoped, tag = 'output window, operand 0']
    #allocation3 [shape = 's32[2]{0}', space=sflag, size = 0x8, scoped, tag = 'scoped memory for tpu_custom_call.1']
    %8 = vsyncpa [#allocation3], 0
    %s9 = scalar_lea.sflag [#allocation3], 1
    %10 = vsyncpa %s9, 0
    loop: start=0, step=1, limit=4
    $region2: #{tpu_custom_call.1} parent=1 // loop_pre_header
      _
    $region3: #{tpu_custom_call.1} parent=1 // loop_header
      %s12 = sphi 0, %s16
      %p13 = scmp.ge.s32.totalorder %s12, 4
      %s19 = sphi 0, %s31
      %s20 = sphi 0, %s27
      %s21 = sphi 0, %s19
      %s22 = sphi 0, %s20
      %s23 = sphi 0, %s21
      %s24 = sphi 0, %s22
      %s36 = sphi 0, %s38
      %s39 = sphi 0, %s36
      %s40 = sphi 0, %s39
      %s56 = sphi 0, %s40
      %s60 = sphi 0, %s60
      %s62 = sphi 0, %s60
      %s63 = sphi 0, %s62
      %s77 = sphi 0, %s63
      %s81 = sphi 0, %s81
      %s83 = sphi 0, %s81
      %s84 = sphi 0, %s83
      %s98 = sphi 0, %s84
      %s106 = sphi 0, %s108
      %s109 = sphi 0, %s106
      %s110 = sphi 0, %s109
      %s126 = sphi 0, %s110
    $region4: #{tpu_custom_call.1} parent=1 // loop_header_branch
      %15 = sbr.rel (%p13) target = $region8
    $region5: #{tpu_custom_call.1} parent=1 // loop_body
      %s17 = ssub.s32 %s12, 1
      %s18 = ssub.s32 %s12, 2
      %s25 = sadd.s32 1, %s20
      %p26 = scmp.ge.s32.totalorder %s25, 1
      %s27 = scalar_select %p26, 0, %s25
      %s28 = sadd.s32 1, %s19
      %s29 = scalar_select %p26, %s28, %s19
      %p30 = scmp.ge.s32.totalorder %s29, 2
      %s31 = scalar_select %p30, 0, %s29
      %s32 = ssub.s32 %s19, %s31
      %s33 = ssub.s32 %s20, %s27
      %s34 = sor.u32 %s32, %s33
      %p35 = scmp.eq.s32.totalorder %s34, 0
      %s37 = sadd.s32 %s36, 1
      %s38 = scalar_select %p35, %s36, %s37
      %p41 = pneg %p35
      %p42 = scmp.eq.s32.totalorder %s12, 1
      %p43 = por %p41, %p42
      %p44 = scmp.ne.s32.totalorder %s36, %s39
      %p45 = scmp.eq.s32.totalorder %s12, 0
      %p46 = por %p44, %p45
      %p47 = scmp.ne.s32.totalorder %s36, %s39
      %p48 = scmp.eq.s32.totalorder %s17, 1
      %p49 = por %p47, %p48
      %p50 = scmp.ne.s32.totalorder %s39, %s40
      %p51 = scmp.eq.s32.totalorder %s17, 0
      %p52 = por %p50, %p51
      %p53 = scmp.ne.s32.totalorder %s39, %s40
      %p54 = scmp.eq.s32.totalorder %s18, 1
      %p55 = por %p53, %p54
      %p57 = scmp.ne.s32.totalorder %s40, %s56
      %p58 = scmp.eq.s32.totalorder %s18, 0
      %p59 = por %p57, %p58
      %s61 = sadd.s32 %s60, 1
      %p64 = scmp.eq.s32.totalorder %s12, 1
      %p65 = scmp.ne.s32.totalorder %s60, %s62
      %p66 = scmp.eq.s32.totalorder %s12, 0
      %p67 = por %p65, %p66
      %p68 = scmp.ne.s32.totalorder %s60, %s62
      %p69 = scmp.eq.s32.totalorder %s17, 1
      %p70 = por %p68, %p69
      %p71 = scmp.ne.s32.totalorder %s62, %s63
      %p72 = scmp.eq.s32.totalorder %s17, 0
      %p73 = por %p71, %p72
      %p74 = scmp.ne.s32.totalorder %s62, %s63
      %p75 = scmp.eq.s32.totalorder %s18, 1
      %p76 = por %p74, %p75
      %p78 = scmp.ne.s32.totalorder %s63, %s77
      %p79 = scmp.eq.s32.totalorder %s18, 0
      %p80 = por %p78, %p79
      %s82 = sadd.s32 %s81, 1
      %p85 = scmp.eq.s32.totalorder %s12, 1
      %p86 = scmp.ne.s32.totalorder %s81, %s83
      %p87 = scmp.eq.s32.totalorder %s12, 0
      %p88 = por %p86, %p87
      %p89 = scmp.ne.s32.totalorder %s81, %s83
      %p90 = scmp.eq.s32.totalorder %s17, 1
      %p91 = por %p89, %p90
      %p92 = scmp.ne.s32.totalorder %s83, %s84
      %p93 = scmp.eq.s32.totalorder %s17, 0
      %p94 = por %p92, %p93
      %p95 = scmp.ne.s32.totalorder %s83, %s84
      %p96 = scmp.eq.s32.totalorder %s18, 1
      %p97 = por %p95, %p96
      %p99 = scmp.ne.s32.totalorder %s84, %s98
      %p100 = scmp.eq.s32.totalorder %s18, 0
      %p101 = por %p99, %p100
      %s102 = ssub.s32 %s19, %s31
      %s103 = ssub.s32 %s20, %s27
      %s104 = sor.u32 %s102, %s103
      %p105 = scmp.eq.s32.totalorder %s104, 0
      %s107 = sadd.s32 %s106, 1
      %s108 = scalar_select %p105, %s106, %s107
      %p111 = pneg %p105
      %p112 = scmp.eq.s32.totalorder %s12, 1
      %p113 = por %p111, %p112
      %p114 = scmp.ne.s32.totalorder %s106, %s109
      %p115 = scmp.eq.s32.totalorder %s12, 0
      %p116 = por %p114, %p115
      %p117 = scmp.ne.s32.totalorder %s106, %s109
      %p118 = scmp.eq.s32.totalorder %s17, 1
      %p119 = por %p117, %p118
      %p120 = scmp.ne.s32.totalorder %s109, %s110
      %p121 = scmp.eq.s32.totalorder %s17, 0
      %p122 = por %p120, %p121
      %p123 = scmp.ne.s32.totalorder %s109, %s110
      %p124 = scmp.eq.s32.totalorder %s18, 1
      %p125 = por %p123, %p124
      %p127 = scmp.ne.s32.totalorder %s110, %s126
      %p128 = scmp.eq.s32.totalorder %s18, 0
      %p129 = por %p127, %p128
      %p130 = scmp.le.s32.totalorder 1, %s12
      %p131 = scmp.lt.s32.totalorder %s12, 3
      %p132 = pnand %p130, %p131
      %p133 = pneg %p132
      // Predicated region
      $region9: #{tpu_custom_call.1} parent=5 // pred_check
        _
      $region10: #{tpu_custom_call.1} parent=5 // pred_check_branch
        %135 = sbr.rel (%p132) target = $region12
      $region11: #{tpu_custom_call.1} parent=5 // pred_region
        %s136 = ssub.s32 %s12, 1
        // Predicated region
        $region13: #{tpu_custom_call.1} parent=11 // pred_check
          %p137 = pneg %p73
        $region14: #{tpu_custom_call.1} parent=11 // pred_check_branch
          %139 = sbr.rel (%p137) target = $region16
        $region15: #{tpu_custom_call.1} parent=11 // pred_region
          _
        $region16: #{tpu_custom_call.1} parent=11 // pred_fallthru
          _
        // Predicated region
        $region17: #{tpu_custom_call.1} parent=11 // pred_check
          %p140 = pneg %p94
        $region18: #{tpu_custom_call.1} parent=11 // pred_check_branch
          %142 = sbr.rel (%p140) target = $region20
        $region19: #{tpu_custom_call.1} parent=11 // pred_region
          _
        $region20: #{tpu_custom_call.1} parent=11 // pred_fallthru
          _
      $region12: #{tpu_custom_call.1} parent=5 // pred_fallthru
        _
      %p143 = scmp.lt.s32.totalorder %s12, 2
      // Predicated region
      $region21: #{tpu_custom_call.1} parent=5 // pred_check
        %p144 = pneg %p143
      $region22: #{tpu_custom_call.1} parent=5 // pred_check_branch
        %146 = sbr.rel (%p144) target = $region24
      $region23: #{tpu_custom_call.1} parent=5 // pred_region
        // Predicated region
        $region25: #{tpu_custom_call.1} parent=23 // pred_check
          %p147 = pneg %p46
        $region26: #{tpu_custom_call.1} parent=23 // pred_check_branch
          %149 = sbr.rel (%p147) target = $region28
        $region27: #{tpu_custom_call.1} parent=23 // pred_region
          %p150 = scmp.lt.s32.totalorder %s19, 1
          %s151 = scalar_select %p150, %s19, 1
          %p152 = scmp.lt.s32.totalorder %s20, 0
          %s153 = scalar_select %p152, %s20, 0
          %s154 = smul.addr %s151, 2
          %s155 = sadd.s32 %s153, %s154
          %s156 = smul.addr %s155, 4
          %s157 = scalar_lea.vmem %s0, %s156
        $region28: #{tpu_custom_call.1} parent=23 // pred_fallthru
          _
      $region24: #{tpu_custom_call.1} parent=5 // pred_fallthru
        _
      %p158 = scmp.le.s32.totalorder 1, %s12
      %p159 = scmp.lt.s32.totalorder %s12, 3
      %p160 = pnand %p158, %p159
      %p161 = pneg %p160
      // Predicated region
      $region29: #{tpu_custom_call.1} parent=5 // pred_check
        _
      $region30: #{tpu_custom_call.1} parent=5 // pred_check_branch
        %163 = sbr.rel (%p160) target = $region32
      $region31: #{tpu_custom_call.1} parent=5 // pred_region
        %s164 = ssub.s32 %s12, 1
        %p165 = scmp.lt.s32.totalorder %s21, 1
        %s166 = scalar_select %p165, %s21, 1
        %p167 = scmp.lt.s32.totalorder %s22, 0
        %s168 = scalar_select %p167, %s22, 0
        %s169 = smul.addr %s166, 2
        %s170 = sadd.s32 %s168, %s169
        %s171 = smul.addr %s170, 4
        %s172 = scalar_lea.vmem %s0, %s171
        %p173 = pneg %p52
        %p174 = pneg %p49
        %p175 = pneg %p73
        %p176 = pneg %p70
        %p177 = pneg %p94
        %p178 = pneg %p91
        %p179 = pneg %p122
        %p180 = pneg %p119
        %s181 = sand.u32 %s109, 1
        %s182 = scalar_lea.sflag [#allocation3], %s181
        %s183 = sand.u32 %s109, 1
        %s184 = smul.addr %s183, 16
        %s185 = scalar_lea.vmem [#allocation2], %s184
        %p186 = scmp.lt.s32.totalorder %s21, 1
        %s187 = scalar_select %p186, %s21, 1
        %p188 = scmp.lt.s32.totalorder %s22, 0
        %s189 = scalar_select %p188, %s22, 0
        %s190 = smul.addr %s187, 2
        %s191 = sadd.s32 %s189, %s190
        %s192 = smul.addr %s191, 4
        %s193 = scalar_lea.vmem %s0, %s192
        %v195 = vld [vmem:[%s1] sm:$0xf]
        %v196 = vld [vmem:[%s1 + $0x4] sm:$0xf]
        %v197 = vld [vmem:[%s1 + $0x8] sm:$0xf]
        %v198 = vld [vmem:[%s1 + $0xc] sm:$0xf]
        %v199 = vld [vmem:[%s193] sm:$0xf]
        %v200 = vld [vmem:[%s193 + $0x4] sm:$0xf]
        %v201 = vld [vmem:[%s2] sm:$0xff]
        %v202 = vld [vmem:[%s2 + $0x8] sm:$0xff]
        %v203 = vld [vmem:[%s2 + $0x10] sm:$0xff]
        %v204 = vld [vmem:[%s2 + $0x18] sm:$0xff]
        %206 = vset.pattern.permute.xlu0 0
        %207 = vperm.xlu0 %206, %v201
        %v208 = vpop.permute.xlu0 %207
        %211 = vset.pattern.permute.xlu0 0
        %212 = vperm.xlu0 %211, %v202
        %v213 = vpop.permute.xlu0 %212
        %216 = vset.pattern.permute.xlu0 0
        %217 = vperm.xlu0 %216, %v203
        %v218 = vpop.permute.xlu0 %217
        %221 = vset.pattern.permute.xlu0 0
        %222 = vperm.xlu0 %221, %v204
        %v223 = vpop.permute.xlu0 %222
        %v229 = vunpack.c.l.b16 %v195
        %v230 = vunpack.c.l.b16 %v196
        %v231 = vunpack.c.l.b16 %v197
        %v232 = vunpack.c.l.b16 %v198
        %v233 = vpack.c.b16 %v230, %v229
        %v234 = vpack.c.b16 %v232, %v231
        %v237 = vunpack.c.l.b16 %v199
        %v238 = vunpack.c.l.b16 %v200
        %v239 = vpack.c.b16 %v238, %v237
        %vm241 = vcmask 130048
        %v243 = vsel %vm241, %v233, 0
        %v246 = vsel %vm241, %v234, 0
        %248 = vmatprep.subr.bf16.mxu0 0
        %249 = vmatpush1.bf16.msra.mxu0 %v239
        %250 = vmatprep.subr.bf16.mxu0 0
        %251 = vmatpush1.bf16.msra.mxu0 0
        %252 = vmatprep.subr.bf16.mxu0 0
        %253 = vmatpush1.bf16.msra.mxu0 0
        %254 = vmatprep.subr.bf16.mxu0 0
        %255 = vmatpush1.bf16.msra.mxu0 0
        %256 = vmatprep.subr.bf16.mxu0 0
        %257 = vmatpush1.bf16.msra.mxu0 0
        %258 = vmatprep.subr.bf16.mxu0 0
        %259 = vmatpush1.bf16.msra.mxu0 0
        %260 = vmatprep.subr.bf16.mxu0 0
        %261 = vmatpush1.bf16.msra.mxu0 0
        %262 = vmatprep.subr.bf16.mxu0 0
        %263 = vmatpush1.bf16.msra.mxu0 0
        %264 = vmatprep.subr.bf16.mxu0 0
        %265 = vmatpush1.bf16.msra.mxu0 0
        %266 = vmatprep.subr.bf16.mxu0 0
        %267 = vmatpush1.bf16.msra.mxu0 0
        %268 = vmatprep.subr.bf16.mxu0 0
        %269 = vmatpush1.bf16.msra.mxu0 0
        %270 = vmatprep.subr.bf16.mxu0 0
        %271 = vmatpush1.bf16.msra.mxu0 0
        %272 = vmatprep.subr.bf16.mxu0 0
        %273 = vmatpush1.bf16.msra.mxu0 0
        %274 = vmatprep.subr.bf16.mxu0 0
        %275 = vmatpush1.bf16.msra.mxu0 0
        %276 = vmatprep.subr.bf16.mxu0 0
        %277 = vmatpush1.bf16.msra.mxu0 0
        %278 = vmatprep.subr.bf16.mxu0 0
        %279 = vmatpush1.bf16.msra.mxu0 0
        %280 = vmatprep.mubr.bf16.mxu0 0
        %281 = vmatmul.mubr.bf16.gmra.mrb[0].mxu0 %v243
        %v282 = vpop.f32.mrb[0].mxu0
        %v283 = vadd.f32 %v208, %v282
        %v284 = vpop.f32.mrb[0].mxu0
        %v285 = vpop.f32.mrb[0].mxu0
        %v286 = vadd.f32 %v213, %v285
        %v287 = vpop.f32.mrb[0].mxu0
        %288 = vmatprep.mubr.bf16.mxu0 0
        %289 = vmatmul.mubr.bf16.gmra.mrb[0].mxu0 %v246
        %v290 = vpop.f32.mrb[0].mxu0
        %v291 = vadd.f32 %v218, %v290
        %v292 = vpop.f32.mrb[0].mxu0
        %v293 = vpop.f32.mrb[0].mxu0
        %v294 = vadd.f32 %v223, %v293
        %v295 = vpop.f32.mrb[0].mxu0
        %296 = vdwg.mxu0
        %v297 = vmul.f32 %v283, 0.5
        %v298 = vmul.f32 %v286, 0.5
        %v299 = vmul.f32 %v291, 0.5
        %v300 = vmul.f32 %v294, 0.5
        %v301 = vtanh.pop %v297
        %v302 = vtanh.pop %v298
        %v303 = vtanh.pop %v299
        %v304 = vtanh.pop %v300
        %v305 = vmul.f32 %v301, 0.5
        %v306 = vmul.f32 %v302, 0.5
        %v307 = vmul.f32 %v303, 0.5
        %v308 = vmul.f32 %v304, 0.5
        %v309 = vadd.f32 %v305, 0.5
        %v310 = vadd.f32 %v306, 0.5
        %v311 = vadd.f32 %v307, 0.5
        %v312 = vadd.f32 %v308, 0.5
        %v313 = vmul.f32 %v283, %v309
        %v314 = vmul.f32 %v286, %v310
        %v315 = vmul.f32 %v291, %v311
        %v316 = vmul.f32 %v294, %v312
        %v317 = vpack.c.bf16 %v314, %v313
        %v318 = vpack.c.bf16 %v316, %v315
        %v321 = vunpack.c.l.b16 %v317
        %v322 = vunpack.c.h.b16 %v317
        %v323 = vunpack.c.l.b16 %v318
        %v324 = vunpack.c.h.b16 %v318
        %v325 = vpack.c.b16 %v321, %v321
        %v326 = vpack.c.b16 %v322, %v322
        %v327 = vpack.c.b16 %v323, %v323
        %v328 = vpack.c.b16 %v324, %v324
        %333 = vst [vmem:[%s185] sm:$0xf] %v325
        %334 = vst [vmem:[%s185 + $0x4] sm:$0xf] %v326
        %335 = vst [vmem:[%s185 + $0x8] sm:$0xf] %v327
        %336 = vst [vmem:[%s185 + $0xc] sm:$0xf] %v328
        %s337 = sand.u32 %s109, 1
        %s338 = scalar_lea.sflag [#allocation3], %s337
        %s339 = sand.u32 %s109, 1
        %s340 = smul.addr %s339, 16
        %s341 = scalar_lea.vmem [#allocation2], %s340
        // Predicated region
        $region33: #{tpu_custom_call.1} parent=31 // pred_check
          %p342 = pneg %p119
        $region34: #{tpu_custom_call.1} parent=31 // pred_check_branch
          %344 = sbr.rel (%p342) target = $region36
        $region35: #{tpu_custom_call.1} parent=31 // pred_region
          %s346 = ssub.s32 256, 256
          %347 = vsyncadd %s338, %s346
          %s348 = smul.addr %s21, 4
          %s349 = sadd.s32 %s22, %s348
          %s350 = smul.addr %s349, 64
          %s351 = scalar_lea.hbm %s3, %s350
          %s352 = sshll.u32 %s341, 4
          %s353 = int_to_ptr.vmem [resolvable:$true] %s352
          %358 = dma.vmem_to_hbm [thread:$0]  %s353, 256, %s351, %s338, 64, 64, 4
        $region36: #{tpu_custom_call.1} parent=31 // pred_fallthru
          _
      $region32: #{tpu_custom_call.1} parent=5 // pred_fallthru
        _
      %p359 = scmp.le.s32.totalorder 2, %s12
      // Predicated region
      $region37: #{tpu_custom_call.1} parent=5 // pred_check
        %p360 = pneg %p359
      $region38: #{tpu_custom_call.1} parent=5 // pred_check_branch
        %362 = sbr.rel (%p360) target = $region40
      $region39: #{tpu_custom_call.1} parent=5 // pred_region
        %s363 = ssub.s32 %s12, 2
        // Predicated region
        $region41: #{tpu_custom_call.1} parent=39 // pred_check
          %p364 = pneg %p125
        $region42: #{tpu_custom_call.1} parent=39 // pred_check_branch
          %366 = sbr.rel (%p364) target = $region44
        $region43: #{tpu_custom_call.1} parent=39 // pred_region
          %s367 = sand.u32 %s110, 1
          %s368 = scalar_lea.sflag [#allocation3], %s367
          %s369 = sand.u32 %s110, 1
          %s370 = smul.addr %s369, 16
          %s371 = scalar_lea.vmem [#allocation2], %s370
          %372 = dma.done %s368, 256
        $region44: #{tpu_custom_call.1} parent=39 // pred_fallthru
          _
      $region40: #{tpu_custom_call.1} parent=5 // pred_fallthru
        _
    $region6: #{tpu_custom_call.1} parent=1 // loop_footer
      %s16 = sadd.s32 1, %s12
    $region7: #{tpu_custom_call.1} parent=1 // loop_footer_branch
      %11 = sbr.rel target = $region3
    $region8: #{tpu_custom_call.1} parent=1 // loop_exit
      _
    %373 = vsyncpa [#allocation3], 1
    %s374 = scalar_lea.sflag [#allocation3], 1
    %375 = vsyncpa %s374, 1

</llo_original>
